<compile_context>
chip_gen: v5e
topology: v5e:2x2
jax: 0.10.0
libtpu: 0.0.40
codegen_flags: <defaults>
</compile_context>

<pallas_src>
import functools
from typing import NamedTuple

import jax
import jax.numpy as jnp
from jax.experimental import pallas as pl
from jax.experimental.pallas import tpu as pltpu

LANE = 128    # feature dims padded to the 128-lane width (lane-dense stores)
SUBLANE = 8   # batch rows padded to the sublane width


def _round_up(v, m):
    return ((v + m - 1) // m) * m


# ---------------------------------------------------------------------------
# Fused kernel: o = sigmoid(act(...act(x @ W0 + b0)...) @ W_{L-1} + b_{L-1})
# ---------------------------------------------------------------------------
def _fused_mlp_kernel(*refs, num_layers, non_lin):
    """refs = (x_ref, w0, b0, w1, b1, ..., w_{L-1}, b_{L-1}, o_ref)."""
    x_ref = refs[0]
    o_ref = refs[-1]

    h = x_ref[...]                          # (TILE_B, D0_pad), compute dtype
    for i in range(num_layers):
        w = refs[1 + 2 * i][...]            # (Din_pad, Dout_pad), compute dtype
        b = refs[2 + 2 * i][...]            # (1, Dout_pad), f32
        # MXU matmul with f32 accumulation; bias add + activation stay in f32.
        y = jnp.dot(h, w, preferred_element_type=jnp.float32) + b
        if i == num_layers - 1:
            o_ref[...] = jax.nn.sigmoid(y).astype(o_ref.dtype)   # EUP epilogue
        else:
            y = jnp.tanh(y) if non_lin == "tanh" else jnp.maximum(y, 0.0)
            # nn.Dropout (eval mode) is the identity.
            h = y.astype(x_ref.dtype)       # back to compute dtype for next dot


# ---------------------------------------------------------------------------
# One-time parameter preparation (padding hoisted out of the forward pass).
# ---------------------------------------------------------------------------
class PreparedParams(NamedTuple):
    flat: tuple        # (w0_p, b0_p, ..., w_{L-1}_p, b_{L-1}_p), padded
    dims: tuple        # real feature dims (Din, H, ..., Dout)
    dims_pad: tuple    # lane-padded feature dims
    compute_dtype: object


def prepare_params(params, compute_dtype=jnp.bfloat16):
    """Pad weights/biases ONCE.  params: list of (W [Din,Dout], b [1,Dout])."""
    dims = [params[0][0].shape[0]] + [w.shape[1] for (w, _) in params]
    dims_pad = [_round_up(d, LANE) for d in dims]
    flat = []
    for i, (w, b) in enumerate(params):
        din, dout = w.shape
        w_p = jnp.pad(w.astype(compute_dtype),
                      ((0, dims_pad[i] - din), (0, dims_pad[i + 1] - dout)))
        b_p = jnp.pad(b.astype(jnp.float32).reshape(1, dout),
                      ((0, 0), (0, dims_pad[i + 1] - dout)))
        flat += [w_p, b_p]
    return PreparedParams(tuple(flat), tuple(dims), tuple(dims_pad),
                          compute_dtype)


# ---------------------------------------------------------------------------
# Forward pass (single fused pallas_call over a 1-D batch grid).
# ---------------------------------------------------------------------------
def fused_mlp_forward(x, prepared, non_lin="relu", tile_b=512,
                      single_buffer_weights=True):
    B, Din = x.shape
    assert Din == prepared.dims[0]
    dims_pad = prepared.dims_pad
    cdt = prepared.compute_dtype
    num_layers = len(prepared.flat) // 2

    # --- batch tiling --------------------------------------------------------
    b8 = _round_up(B, SUBLANE)
    tile_b = _round_up(min(tile_b, b8), SUBLANE)
    # v7x has 2 TensorCores: make sure the "parallel" batch axis has >= 2 grid
    # steps whenever the batch allows (one extra ~0.35us step is noise on the
    # single-TC v5e/v6e).
    if b8 >= 2 * SUBLANE and b8 // tile_b < 2:
        tile_b = _round_up(pl.cdiv(b8, 2), SUBLANE)
    b_pad = _round_up(b8, tile_b)
    grid = (b_pad // tile_b,)

    # --- pad x only (params are pre-padded once) -----------------------------
    x_p = jnp.pad(x.astype(cdt), ((0, b_pad - B), (0, dims_pad[0] - Din)))

    # --- cost / VMEM accounting ----------------------------------------------
    c_it = jnp.dtype(cdt).itemsize
    o_it = jnp.dtype(x.dtype).itemsize
    w_bytes = sum(int(a.size) * a.dtype.itemsize for a in prepared.flat)
    flops = sum(2 * b_pad * dims_pad[i] * dims_pad[i + 1]
                for i in range(num_layers))
    transcend = b_pad * dims_pad[-1]                       # final sigmoid
    if non_lin == "tanh":
        transcend += b_pad * sum(dims_pad[1:-1])
    bytes_accessed = x_p.size * c_it + w_bytes + b_pad * dims_pad[-1] * o_it

    # Explicit VMEM budget (scoped default is 16 MiB v5e / 32 MiB v6e, v7x).
    w_buf = 1 if single_buffer_weights else 2
    vmem_need = (w_bytes * w_buf
                 + 2 * tile_b * dims_pad[0] * c_it         # x tile, 2 buffers
                 + 2 * tile_b * dims_pad[-1] * o_it        # out tile, 2 buffers
                 + 2 * tile_b * max(dims_pad) * 4)         # f32 intermediates
    vmem_limit = min(max(32 << 20, int(vmem_need * 1.3)), 128 << 20)

    # TODO(synk): once total padded weight bytes exceed ~20 MiB (v7x, 64 MiB
    # VMEM) / ~40 MiB (v6e), add a second grid axis tiling each weight along
    # its output (N) dimension (e.g. 512-wide) or fission into per-layer calls.

    def _build(use_buffered_1):
        in_specs = [pl.BlockSpec((tile_b, dims_pad[0]), lambda g: (g, 0))]
        for i in range(num_layers):
            w_shape = prepared.flat[2 * i].shape
            b_shape = prepared.flat[2 * i + 1].shape
            if use_buffered_1:
                # Constant index_map: fetched once -> a single buffer halves
                # the resident VMEM these blocks hold, at zero perf cost.
                in_specs.append(pl.BlockSpec(w_shape, lambda g: (0, 0),
                                             pipeline_mode=pl.Buffered(1)))
                in_specs.append(pl.BlockSpec(b_shape, lambda g: (0, 0),
                                             pipeline_mode=pl.Buffered(1)))
            else:
                in_specs.append(pl.BlockSpec(w_shape, lambda g: (0, 0)))
                in_specs.append(pl.BlockSpec(b_shape, lambda g: (0, 0)))
        out_specs = pl.BlockSpec((tile_b, dims_pad[-1]), lambda g: (g, 0))
        return pl.pallas_call(
            functools.partial(_fused_mlp_kernel, num_layers=num_layers,
                              non_lin=non_lin),
            out_shape=jax.ShapeDtypeStruct((b_pad, dims_pad[-1]), x.dtype),
            grid=grid,
            in_specs=in_specs,
            out_specs=out_specs,
            compiler_params=pltpu.CompilerParams(
                dimension_semantics=("parallel",),
                vmem_limit_bytes=vmem_limit),
            cost_estimate=pl.CostEstimate(
                flops=flops, transcendentals=transcend,
                bytes_accessed=bytes_accessed),
        )

    if single_buffer_weights:
        try:
            out_p = _build(True)(x_p, *prepared.flat)
        except Exception:
            # pl.Buffered(1) unsupported on this jax version/backend; fall back
            # to default double buffering (correctness unaffected).
            out_p = _build(False)(x_p, *prepared.flat)
    else:
        out_p = _build(False)(x_p, *prepared.flat)

    return out_p[:B, :prepared.dims[-1]]


# ---------------------------------------------------------------------------
# Parameter init (PyTorch nn.Linear-style uniform +/- 1/sqrt(fan_in)),
# weights stored transposed: [in_features, out_features].
# ---------------------------------------------------------------------------
def init_params(key, input_dim, hidden_dim, output_dim, num_layers):
    dims = []
    for i in range(num_layers):
        if i == 0:
            dims.append((input_dim, hidden_dim))
        elif i == num_layers - 1:
            dims.append((hidden_dim, output_dim))
        else:
            dims.append((hidden_dim, hidden_dim))

    params = []
    keys = jax.random.split(key, 2 * num_layers)
    for i, (din, dout) in enumerate(dims):
        bound = 1.0 / jnp.sqrt(jnp.float32(din))
        w = jax.random.uniform(keys[2 * i], (din, dout), jnp.float32,
                               minval=-bound, maxval=bound)
        b = jax.random.uniform(keys[2 * i + 1], (1, dout), jnp.float32,
                               minval=-bound, maxval=bound)
        params.append((w, b))
    return params


def reference_forward(x, params, non_lin="relu"):
    """Pure-JAX reference for correctness checking."""
    nb_layers = len(params)
    for i, (w, b) in enumerate(params):
        y = x @ w + b
        if i == nb_layers - 1:
            x = jax.nn.sigmoid(y)
        else:
            x = jnp.maximum(y, 0.0) if non_lin == "relu" else jnp.tanh(y)
    return x


if __name__ == "__main__":
    # Small shapes consistent with the module: a plain MLP on flat features.
    input_dim = 16
    hidden_dim = 32
    output_dim = 8
    hyperparams = {"num_layers": 3, "dropout": 0.7, "non_lin": "relu"}

    key = jax.random.PRNGKey(0)
    k_x, k_x2, k_p = jax.random.split(key, 3)
    x = jax.random.normal(k_x, (8, input_dim), jnp.float32)
    x2 = jax.random.normal(k_x2, (24, input_dim), jnp.float32)
    params = init_params(k_p, input_dim, hidden_dim, output_dim,
                         hyperparams["num_layers"])

    ref = reference_forward(x, params, non_lin=hyperparams["non_lin"])
    ref2 = reference_forward(x2, params, non_lin=hyperparams["non_lin"])

    # f32 compute path (exact vs reference), single grid step.
    prep_f32 = prepare_params(params, compute_dtype=jnp.float32)
    out = fused_mlp_forward(x, prep_f32, non_lin=hyperparams["non_lin"])
    out = jax.block_until_ready(out)
    assert out.shape == (8, output_dim)
    assert jnp.allclose(out, ref, atol=1e-5, rtol=1e-5)

    # Larger batch: exercises the >=2-grid-step (dual-TensorCore) path.
    out2 = fused_mlp_forward(x2, prep_f32, non_lin=hyperparams["non_lin"])
    out2 = jax.block_until_ready(out2)
    assert out2.shape == (24, output_dim)
    assert jnp.allclose(out2, ref2, atol=1e-5, rtol=1e-5)

    # bf16 compute path (default / recommended on v6e+v7x): f32 accumulation,
    # f32 bias + activations, looser tolerance.
    prep_bf16 = prepare_params(params, compute_dtype=jnp.bfloat16)
    out_bf16 = fused_mlp_forward(x, prep_bf16, non_lin=hyperparams["non_lin"])
    out_bf16 = jax.block_until_ready(out_bf16)
    assert jnp.allclose(out_bf16.astype(jnp.float32), ref, atol=6e-2, rtol=6e-2)

    print("KERNEL_OK")
</pallas_src>

<mosaic_0001>
module attributes {stable_mosaic.version = 11 : i64} {
  func.func @_fused_mlp_kernel(%arg0: i32, %arg1: memref<8x128xf32, #tpu.memory_space<vmem>>, %arg2: memref<128x128xf32, #tpu.memory_space<vmem>>, %arg3: memref<1x128xf32, #tpu.memory_space<vmem>>, %arg4: memref<128x128xf32, #tpu.memory_space<vmem>>, %arg5: memref<1x128xf32, #tpu.memory_space<vmem>>, %arg6: memref<128x128xf32, #tpu.memory_space<vmem>>, %arg7: memref<1x128xf32, #tpu.memory_space<vmem>>, %arg8: memref<8x128xf32, #tpu.memory_space<vmem>>) attributes {dimension_semantics = [#tpu.dimension_semantics<parallel>], iteration_bounds = array<i64: 1>, scalar_prefetch = 0 : i64, scratch_operands = 0 : i64, tpu.core_type = #tpu.core_type<tc>, window_params = [{transform_indices = @transform_0, window_bounds = array<i64: 8, 128>}, {pipeline_mode = #tpu.pipeline_mode<synchronous>, transform_indices = @transform_1, window_bounds = array<i64: 128, 128>}, {pipeline_mode = #tpu.pipeline_mode<synchronous>, transform_indices = @transform_2, window_bounds = array<i64: 1, 128>}, {pipeline_mode = #tpu.pipeline_mode<synchronous>, transform_indices = @transform_3, window_bounds = array<i64: 128, 128>}, {pipeline_mode = #tpu.pipeline_mode<synchronous>, transform_indices = @transform_4, window_bounds = array<i64: 1, 128>}, {pipeline_mode = #tpu.pipeline_mode<synchronous>, transform_indices = @transform_5, window_bounds = array<i64: 128, 128>}, {pipeline_mode = #tpu.pipeline_mode<synchronous>, transform_indices = @transform_6, window_bounds = array<i64: 1, 128>}, {transform_indices = @transform_7, window_bounds = array<i64: 8, 128>}]} {
    %c0 = arith.constant 0 : index
    %c0_0 = arith.constant 0 : index
    %0 = vector.load %arg1[%c0, %c0_0] : memref<8x128xf32, #tpu.memory_space<vmem>>, vector<8x128xf32>
    %c0_1 = arith.constant 0 : index
    %c0_2 = arith.constant 0 : index
    %1 = vector.load %arg2[%c0_1, %c0_2] : memref<128x128xf32, #tpu.memory_space<vmem>>, vector<128x128xf32>
    %c0_3 = arith.constant 0 : index
    %c0_4 = arith.constant 0 : index
    %2 = vector.load %arg3[%c0_3, %c0_4] : memref<1x128xf32, #tpu.memory_space<vmem>>, vector<1x128xf32>
    %cst = arith.constant dense<0.000000e+00> : vector<8x128xf32>
    %3 = tpu.matmul %0, %1, %cst {dimension_numbers = #tpu.dot_dimension_numbers<[1], [0], [0], [1], [0, 0, 1, 1], [], []>} : vector<8x128xf32>, vector<128x128xf32>, vector<8x128xf32> -> vector<8x128xf32>
    %4 = vector.broadcast %2 : vector<1x128xf32> to vector<8x128xf32>
    %5 = arith.addf %3, %4 : vector<8x128xf32>
    %cst_5 = arith.constant 0.000000e+00 : f32
    %6 = vector.broadcast %cst_5 : f32 to vector<8x128xf32>
    %7 = arith.maximumf %5, %6 : vector<8x128xf32>
    %c0_6 = arith.constant 0 : index
    %c0_7 = arith.constant 0 : index
    %8 = vector.load %arg4[%c0_6, %c0_7] : memref<128x128xf32, #tpu.memory_space<vmem>>, vector<128x128xf32>
    %c0_8 = arith.constant 0 : index
    %c0_9 = arith.constant 0 : index
    %9 = vector.load %arg5[%c0_8, %c0_9] : memref<1x128xf32, #tpu.memory_space<vmem>>, vector<1x128xf32>
    %cst_10 = arith.constant dense<0.000000e+00> : vector<8x128xf32>
    %10 = tpu.matmul %7, %8, %cst_10 {dimension_numbers = #tpu.dot_dimension_numbers<[1], [0], [0], [1], [0, 0, 1, 1], [], []>} : vector<8x128xf32>, vector<128x128xf32>, vector<8x128xf32> -> vector<8x128xf32>
    %11 = vector.broadcast %9 : vector<1x128xf32> to vector<8x128xf32>
    %12 = arith.addf %10, %11 : vector<8x128xf32>
    %cst_11 = arith.constant 0.000000e+00 : f32
    %13 = vector.broadcast %cst_11 : f32 to vector<8x128xf32>
    %14 = arith.maximumf %12, %13 : vector<8x128xf32>
    %c0_12 = arith.constant 0 : index
    %c0_13 = arith.constant 0 : index
    %15 = vector.load %arg6[%c0_12, %c0_13] : memref<128x128xf32, #tpu.memory_space<vmem>>, vector<128x128xf32>
    %c0_14 = arith.constant 0 : index
    %c0_15 = arith.constant 0 : index
    %16 = vector.load %arg7[%c0_14, %c0_15] : memref<1x128xf32, #tpu.memory_space<vmem>>, vector<1x128xf32>
    %cst_16 = arith.constant dense<0.000000e+00> : vector<8x128xf32>
    %17 = tpu.matmul %14, %15, %cst_16 {dimension_numbers = #tpu.dot_dimension_numbers<[1], [0], [0], [1], [0, 0, 1, 1], [], []>} : vector<8x128xf32>, vector<128x128xf32>, vector<8x128xf32> -> vector<8x128xf32>
    %18 = vector.broadcast %16 : vector<1x128xf32> to vector<8x128xf32>
    %19 = arith.addf %17, %18 : vector<8x128xf32>
    %20 = arith.negf %19 : vector<8x128xf32>
    %21 = math.exp %20 : vector<8x128xf32>
    %cst_17 = arith.constant 1.000000e+00 : f32
    %22 = vector.broadcast %cst_17 : f32 to vector<8x128xf32>
    %23 = arith.addf %22, %21 : vector<8x128xf32>
    %24 = arith.divf %22, %23 : vector<8x128xf32>
    %c0_18 = arith.constant 0 : index
    %c0_19 = arith.constant 0 : index
    %25 = vector.load %arg8[%c0_18, %c0_19] : memref<8x128xf32, #tpu.memory_space<vmem>>, vector<8x128xf32>
    tpu.vector_store %arg8[%c0_18, %c0_19], %24 {strides = array<i32>} : memref<8x128xf32, #tpu.memory_space<vmem>>, vector<8x128xf32>,
    return
  }
  func.func @transform_0(%arg0: i32) -> (i32, i32) {
    %c0_i32 = arith.constant 0 : i32
    %c0_i32_0 = arith.constant 0 : i32
    return %arg0, %c0_i32 : i32, i32
  }
  func.func @transform_1(%arg0: i32) -> (i32, i32) {
    %c0_i32 = arith.constant 0 : i32
    %c0_i32_0 = arith.constant 0 : i32
    %c0_i32_1 = arith.constant 0 : i32
    return %c0_i32, %c0_i32_0 : i32, i32
  }
  func.func @transform_2(%arg0: i32) -> (i32, i32) {
    %c0_i32 = arith.constant 0 : i32
    %c0_i32_0 = arith.constant 0 : i32
    %c0_i32_1 = arith.constant 0 : i32
    return %c0_i32, %c0_i32_0 : i32, i32
  }
  func.func @transform_3(%arg0: i32) -> (i32, i32) {
    %c0_i32 = arith.constant 0 : i32
    %c0_i32_0 = arith.constant 0 : i32
    %c0_i32_1 = arith.constant 0 : i32
    return %c0_i32, %c0_i32_0 : i32, i32
  }
  func.func @transform_4(%arg0: i32) -> (i32, i32) {
    %c0_i32 = arith.constant 0 : i32
    %c0_i32_0 = arith.constant 0 : i32
    %c0_i32_1 = arith.constant 0 : i32
    return %c0_i32, %c0_i32_0 : i32, i32
  }
  func.func @transform_5(%arg0: i32) -> (i32, i32) {
    %c0_i32 = arith.constant 0 : i32
    %c0_i32_0 = arith.constant 0 : i32
    %c0_i32_1 = arith.constant 0 : i32
    return %c0_i32, %c0_i32_0 : i32, i32
  }
  func.func @transform_6(%arg0: i32) -> (i32, i32) {
    %c0_i32 = arith.constant 0 : i32
    %c0_i32_0 = arith.constant 0 : i32
    %c0_i32_1 = arith.constant 0 : i32
    return %c0_i32, %c0_i32_0 : i32, i32
  }
  func.func @transform_7(%arg0: i32) -> (i32, i32) {
    %c0_i32 = arith.constant 0 : i32
    %c0_i32_0 = arith.constant 0 : i32
    return %arg0, %c0_i32 : i32, i32
  }
}

module attributes {stable_mosaic.version = 11 : i64} {
  func.func @_fused_mlp_kernel(%arg0: i32, %arg1: memref<8x128xf32, #tpu.memory_space<vmem>>, %arg2: memref<128x128xf32, #tpu.memory_space<vmem>>, %arg3: memref<1x128xf32, #tpu.memory_space<vmem>>, %arg4: memref<128x128xf32, #tpu.memory_space<vmem>>, %arg5: memref<1x128xf32, #tpu.memory_space<vmem>>, %arg6: memref<128x128xf32, #tpu.memory_space<vmem>>, %arg7: memref<1x128xf32, #tpu.memory_space<vmem>>, %arg8: memref<8x128xf32, #tpu.memory_space<vmem>>) attributes {dimension_semantics = [#tpu.dimension_semantics<parallel>], iteration_bounds = array<i64: 1>, scalar_prefetch = 0 : i64, scratch_operands = 0 : i64, tpu.core_type = #tpu.core_type<tc>, window_params = [{transform_indices = @transform_0, window_bounds = array<i64: 8, 128>}, {pipeline_mode = #tpu.pipeline_mode<synchronous>, transform_indices = @transform_1, window_bounds = array<i64: 128, 128>}, {pipeline_mode = #tpu.pipeline_mode<synchronous>, transform_indices = @transform_2, window_bounds = array<i64: 1, 128>}, {pipeline_mode = #tpu.pipeline_mode<synchronous>, transform_indices = @transform_3, window_bounds = array<i64: 128, 128>}, {pipeline_mode = #tpu.pipeline_mode<synchronous>, transform_indices = @transform_4, window_bounds = array<i64: 1, 128>}, {pipeline_mode = #tpu.pipeline_mode<synchronous>, transform_indices = @transform_5, window_bounds = array<i64: 128, 128>}, {pipeline_mode = #tpu.pipeline_mode<synchronous>, transform_indices = @transform_6, window_bounds = array<i64: 1, 128>}, {transform_indices = @transform_7, window_bounds = array<i64: 8, 128>}]} {
    %c0 = arith.constant 0 : index
    %c0_0 = arith.constant 0 : index
    %0 = vector.load %arg1[%c0, %c0_0] : memref<8x128xf32, #tpu.memory_space<vmem>>, vector<8x128xf32>
    %c0_1 = arith.constant 0 : index
    %c0_2 = arith.constant 0 : index
    %1 = vector.load %arg2[%c0_1, %c0_2] : memref<128x128xf32, #tpu.memory_space<vmem>>, vector<128x128xf32>
    %c0_3 = arith.constant 0 : index
    %c0_4 = arith.constant 0 : index
    %2 = vector.load %arg3[%c0_3, %c0_4] : memref<1x128xf32, #tpu.memory_space<vmem>>, vector<1x128xf32>
    %cst = arith.constant dense<0.000000e+00> : vector<8x128xf32>
    %3 = tpu.matmul %0, %1, %cst {dimension_numbers = #tpu.dot_dimension_numbers<[1], [0], [0], [1], [0, 0, 1, 1], [], []>} : vector<8x128xf32>, vector<128x128xf32>, vector<8x128xf32> -> vector<8x128xf32>
    %4 = vector.broadcast %2 : vector<1x128xf32> to vector<8x128xf32>
    %5 = arith.addf %3, %4 : vector<8x128xf32>
    %cst_5 = arith.constant 0.000000e+00 : f32
    %6 = vector.broadcast %cst_5 : f32 to vector<8x128xf32>
    %7 = arith.maximumf %5, %6 : vector<8x128xf32>
    %c0_6 = arith.constant 0 : index
    %c0_7 = arith.constant 0 : index
    %8 = vector.load %arg4[%c0_6, %c0_7] : memref<128x128xf32, #tpu.memory_space<vmem>>, vector<128x128xf32>
    %c0_8 = arith.constant 0 : index
    %c0_9 = arith.constant 0 : index
    %9 = vector.load %arg5[%c0_8, %c0_9] : memref<1x128xf32, #tpu.memory_space<vmem>>, vector<1x128xf32>
    %cst_10 = arith.constant dense<0.000000e+00> : vector<8x128xf32>
    %10 = tpu.matmul %7, %8, %cst_10 {dimension_numbers = #tpu.dot_dimension_numbers<[1], [0], [0], [1], [0, 0, 1, 1], [], []>} : vector<8x128xf32>, vector<128x128xf32>, vector<8x128xf32> -> vector<8x128xf32>
    %11 = vector.broadcast %9 : vector<1x128xf32> to vector<8x128xf32>
    %12 = arith.addf %10, %11 : vector<8x128xf32>
    %cst_11 = arith.constant 0.000000e+00 : f32
    %13 = vector.broadcast %cst_11 : f32 to vector<8x128xf32>
    %14 = arith.maximumf %12, %13 : vector<8x128xf32>
    %c0_12 = arith.constant 0 : index
    %c0_13 = arith.constant 0 : index
    %15 = vector.load %arg6[%c0_12, %c0_13] : memref<128x128xf32, #tpu.memory_space<vmem>>, vector<128x128xf32>
    %c0_14 = arith.constant 0 : index
    %c0_15 = arith.constant 0 : index
    %16 = vector.load %arg7[%c0_14, %c0_15] : memref<1x128xf32, #tpu.memory_space<vmem>>, vector<1x128xf32>
    %cst_16 = arith.constant dense<0.000000e+00> : vector<8x128xf32>
    %17 = tpu.matmul %14, %15, %cst_16 {dimension_numbers = #tpu.dot_dimension_numbers<[1], [0], [0], [1], [0, 0, 1, 1], [], []>} : vector<8x128xf32>, vector<128x128xf32>, vector<8x128xf32> -> vector<8x128xf32>
    %18 = vector.broadcast %16 : vector<1x128xf32> to vector<8x128xf32>
    %19 = arith.addf %17, %18 : vector<8x128xf32>
    %20 = arith.negf %19 : vector<8x128xf32>
    %21 = math.exp %20 : vector<8x128xf32>
    %cst_17 = arith.constant 1.000000e+00 : f32
    %22 = vector.broadcast %cst_17 : f32 to vector<8x128xf32>
    %23 = arith.addf %22, %21 : vector<8x128xf32>
    %24 = arith.divf %22, %23 : vector<8x128xf32>
    %c0_18 = arith.constant 0 : index
    %c0_19 = arith.constant 0 : index
    %25 = vector.load %arg8[%c0_18, %c0_19] : memref<8x128xf32, #tpu.memory_space<vmem>>, vector<8x128xf32>
    tpu.vector_store %arg8[%c0_18, %c0_19], %24 {strides = array<i32>} : memref<8x128xf32, #tpu.memory_space<vmem>>, vector<8x128xf32>,
    return
  }
  func.func @transform_0(%arg0: i32) -> (i32, i32) {
    %c0_i32 = arith.constant 0 : i32
    %c0_i32_0 = arith.constant 0 : i32
    return %arg0, %c0_i32 : i32, i32
  }
  func.func @transform_1(%arg0: i32) -> (i32, i32) {
    %c0_i32 = arith.constant 0 : i32
    %c0_i32_0 = arith.constant 0 : i32
    %c0_i32_1 = arith.constant 0 : i32
    return %c0_i32, %c0_i32_0 : i32, i32
  }
  func.func @transform_2(%arg0: i32) -> (i32, i32) {
    %c0_i32 = arith.constant 0 : i32
    %c0_i32_0 = arith.constant 0 : i32
    %c0_i32_1 = arith.constant 0 : i32
    return %c0_i32, %c0_i32_0 : i32, i32
  }
  func.func @transform_3(%arg0: i32) -> (i32, i32) {
    %c0_i32 = arith.constant 0 : i32
    %c0_i32_0 = arith.constant 0 : i32
    %c0_i32_1 = arith.constant 0 : i32
    return %c0_i32, %c0_i32_0 : i32, i32
  }
  func.func @transform_4(%arg0: i32) -> (i32, i32) {
    %c0_i32 = arith.constant 0 : i32
    %c0_i32_0 = arith.constant 0 : i32
    %c0_i32_1 = arith.constant 0 : i32
    return %c0_i32, %c0_i32_0 : i32, i32
  }
  func.func @transform_5(%arg0: i32) -> (i32, i32) {
    %c0_i32 = arith.constant 0 : i32
    %c0_i32_0 = arith.constant 0 : i32
    %c0_i32_1 = arith.constant 0 : i32
    return %c0_i32, %c0_i32_0 : i32, i32
  }
  func.func @transform_6(%arg0: i32) -> (i32, i32) {
    %c0_i32 = arith.constant 0 : i32
    %c0_i32_0 = arith.constant 0 : i32
    %c0_i32_1 = arith.constant 0 : i32
    return %c0_i32, %c0_i32_0 : i32, i32
  }
  func.func @transform_7(%arg0: i32) -> (i32, i32) {
    %c0_i32 = arith.constant 0 : i32
    %c0_i32_0 = arith.constant 0 : i32
    return %arg0, %c0_i32 : i32, i32
  }
}

</mosaic_0001>

<llo_original>
// kernel: tpu_custom_call.1
$region0: #{tpu_custom_call.1}
  #allocation0 [shape = 'u32[]', space=smem, size = 0x4, offset = 0x4, fixed_abs, tag = 'smem constant byte address 0x4 - core index']
  #allocation1 [shape = 'u32[72,128]{1,0:T(1,128)}', space=vmem, size = 0x9000, scoped, tag = 'internal scratch']
  %s0 = inlined_call_operand.hbm [shape: f32[8,128], index: 0, kind: input, shape index: {}]
  %s1 = inlined_call_operand.hbm [shape: f32[128,128], index: 1, kind: input, shape index: {}]
  %s2 = inlined_call_operand.vmem [shape: f32[1,128], index: 2, kind: input, shape index: {}]
  %s3 = inlined_call_operand.hbm [shape: f32[128,128], index: 3, kind: input, shape index: {}]
  %s4 = inlined_call_operand.vmem [shape: f32[1,128], index: 4, kind: input, shape index: {}]
  %s5 = inlined_call_operand.hbm [shape: f32[128,128], index: 5, kind: input, shape index: {}]
  %s6 = inlined_call_operand.vmem [shape: f32[1,128], index: 6, kind: input, shape index: {}]
  %s7 = inlined_call_operand.hbm [shape: f32[8,128], index: 7, kind: output, shape index: {}]
  %s8 = sld [smem:[#allocation0]]
  $region54: #{tpu_custom_call.1} parent=0
    _
  %s10 = ssub.s32 1, %s8
  %s11 = scalar_select 0, %s10, %s8
  $region1: #{tpu_custom_call.1} parent=0
    #allocation2 [shape = 'u8[4096]{0}', space=vmem, size = 0x1000, scoped, tag = 'input window, operand 0, single buffered']
    #allocation3 [shape = 's32[1]{0}', space=sflag, size = 0x4, scoped, tag = 'scoped memory for tpu_custom_call.1']
    #allocation4 [shape = 's32[1]{0}', space=sflag, size = 0x4, scoped, tag = 'scoped memory for tpu_custom_call.1']
    #allocation5 [shape = 'u8[65536]{0}', space=vmem, size = 0x10000, scoped, tag = 'input window, operand 1, single buffered']
    #allocation6 [shape = 's32[1]{0}', space=sflag, size = 0x4, scoped, tag = 'scoped memory for tpu_custom_call.1']
    #allocation7 [shape = 'u8[65536]{0}', space=vmem, size = 0x10000, scoped, tag = 'input window, operand 3, single buffered']
    #allocation8 [shape = 'u8[65536]{0}', space=vmem, size = 0x10000, scoped, tag = 'input window, operand 5, single buffered']
    #allocation9 [shape = 's32[1]{0}', space=sflag, size = 0x4, scoped, tag = 'scoped memory for tpu_custom_call.1']
    #allocation10 [shape = 'u8[4096]{0}', space=vmem, size = 0x1000, scoped, tag = 'output window, operand 0, single buffered']
    %12 = vsyncpa [#allocation3], 0
    %13 = vsyncpa [#allocation6], 0
    %14 = vsyncpa [#allocation9], 0
    %15 = vsyncpa [#allocation4], 0
    // Predicated region
    $region2: #{tpu_custom_call.1} parent=1 // pred_check
      _
    $region3: #{tpu_custom_call.1} parent=1 // pred_check_branch
      %17 = sbr.rel (0) target = $region5
    $region4: #{tpu_custom_call.1} parent=1 // pred_region
      %19 = vsyncadd [#allocation3], 0
      %s21 = sshll.u32 %s0, 4
      %s22 = int_to_ptr.hbm [resolvable:$true] %s21
      %s23 = sshll.u32 [#allocation2], 4
      %s24 = int_to_ptr.vmem [resolvable:$true] %s23
      %26 = dma.hbm_to_vmem [thread:$0]  %s22, 128, %s24, [#allocation3]
    $region5: #{tpu_custom_call.1} parent=1 // pred_fallthru
      _
    // Predicated region
    $region6: #{tpu_custom_call.1} parent=1 // pred_check
      _
    $region7: #{tpu_custom_call.1} parent=1 // pred_check_branch
      %28 = sbr.rel (0) target = $region9
    $region8: #{tpu_custom_call.1} parent=1 // pred_region
      %30 = vsyncadd [#allocation6], 0
      %s31 = sshll.u32 %s1, 4
      %s32 = int_to_ptr.hbm [resolvable:$true] %s31
      %s33 = sshll.u32 [#allocation5], 4
      %s34 = int_to_ptr.vmem [resolvable:$true] %s33
      %39 = dma.hbm_to_vmem [thread:$0]  %s32, 2048, %s34, [#allocation6], 128, 128, 8
    $region9: #{tpu_custom_call.1} parent=1 // pred_fallthru
      _
    // Predicated region
    $region10: #{tpu_custom_call.1} parent=1 // pred_check
      _
    $region11: #{tpu_custom_call.1} parent=1 // pred_check_branch
      %41 = sbr.rel (0) target = $region13
    $region12: #{tpu_custom_call.1} parent=1 // pred_region
      _
    $region13: #{tpu_custom_call.1} parent=1 // pred_fallthru
      _
    // Predicated region
    $region14: #{tpu_custom_call.1} parent=1 // pred_check
      _
    $region15: #{tpu_custom_call.1} parent=1 // pred_check_branch
      %43 = sbr.rel (0) target = $region17
    $region16: #{tpu_custom_call.1} parent=1 // pred_region
      %45 = vsyncadd [#allocation6], 0
      %s46 = sshll.u32 %s3, 4
      %s47 = int_to_ptr.hbm [resolvable:$true] %s46
      %s48 = sshll.u32 [#allocation7], 4
      %s49 = int_to_ptr.vmem [resolvable:$true] %s48
      %54 = dma.hbm_to_vmem [thread:$0]  %s47, 2048, %s49, [#allocation6], 128, 128, 8
    $region17: #{tpu_custom_call.1} parent=1 // pred_fallthru
      _
    // Predicated region
    $region18: #{tpu_custom_call.1} parent=1 // pred_check
      _
    $region19: #{tpu_custom_call.1} parent=1 // pred_check_branch
      %56 = sbr.rel (0) target = $region21
    $region20: #{tpu_custom_call.1} parent=1 // pred_region
      _
    $region21: #{tpu_custom_call.1} parent=1 // pred_fallthru
      _
    // Predicated region
    $region22: #{tpu_custom_call.1} parent=1 // pred_check
      _
    $region23: #{tpu_custom_call.1} parent=1 // pred_check_branch
      %58 = sbr.rel (0) target = $region25
    $region24: #{tpu_custom_call.1} parent=1 // pred_region
      %60 = vsyncadd [#allocation9], 0
      %s61 = sshll.u32 %s5, 4
      %s62 = int_to_ptr.hbm [resolvable:$true] %s61
      %s63 = sshll.u32 [#allocation8], 4
      %s64 = int_to_ptr.vmem [resolvable:$true] %s63
      %69 = dma.hbm_to_vmem [thread:$0]  %s62, 2048, %s64, [#allocation9], 128, 128, 8
    $region25: #{tpu_custom_call.1} parent=1 // pred_fallthru
      _
    // Predicated region
    $region26: #{tpu_custom_call.1} parent=1 // pred_check
      _
    $region27: #{tpu_custom_call.1} parent=1 // pred_check_branch
      %71 = sbr.rel (0) target = $region29
    $region28: #{tpu_custom_call.1} parent=1 // pred_region
      _
    $region29: #{tpu_custom_call.1} parent=1 // pred_fallthru
      _
    // Predicated region
    $region30: #{tpu_custom_call.1} parent=1 // pred_check
      _
    $region31: #{tpu_custom_call.1} parent=1 // pred_check_branch
      %73 = sbr.rel (0) target = $region33
    $region32: #{tpu_custom_call.1} parent=1 // pred_region
      %75 = dma.done [#allocation3], 128
    $region33: #{tpu_custom_call.1} parent=1 // pred_fallthru
      _
    // Predicated region
    $region34: #{tpu_custom_call.1} parent=1 // pred_check
      _
    $region35: #{tpu_custom_call.1} parent=1 // pred_check_branch
      %77 = sbr.rel (0) target = $region37
    $region36: #{tpu_custom_call.1} parent=1 // pred_region
      %79 = dma.done [#allocation6], 2048
    $region37: #{tpu_custom_call.1} parent=1 // pred_fallthru
      _
    // Predicated region
    $region38: #{tpu_custom_call.1} parent=1 // pred_check
      _
    $region39: #{tpu_custom_call.1} parent=1 // pred_check_branch
      %81 = sbr.rel (0) target = $region41
    $region40: #{tpu_custom_call.1} parent=1 // pred_region
      %83 = dma.done [#allocation6], 2048
    $region41: #{tpu_custom_call.1} parent=1 // pred_fallthru
      _
    // Predicated region
    $region42: #{tpu_custom_call.1} parent=1 // pred_check
      _
    $region43: #{tpu_custom_call.1} parent=1 // pred_check_branch
      %85 = sbr.rel (0) target = $region45
    $region44: #{tpu_custom_call.1} parent=1 // pred_region
      %87 = dma.done [#allocation9], 2048
    $region45: #{tpu_custom_call.1} parent=1 // pred_fallthru
      _
    %v88 = vld [vmem:[#allocation2] sm:$0xff]
    %v89 = vld [vmem:[#allocation5] sm:$0xff]
    %v90 = vld [vmem:[#allocation5 + $0x8] sm:$0xff]
    %v91 = vld [vmem:[#allocation5 + $0x10] sm:$0xff]
    %v92 = vld [vmem:[#allocation5 + $0x18] sm:$0xff]
    %v93 = vld [vmem:[#allocation5 + $0x20] sm:$0xff]
    %v94 = vld [vmem:[#allocation5 + $0x28] sm:$0xff]
    %v95 = vld [vmem:[#allocation5 + $0x30] sm:$0xff]
    %v96 = vld [vmem:[#allocation5 + $0x38] sm:$0xff]
    %v97 = vld [vmem:[#allocation5 + $0x40] sm:$0xff]
    %v98 = vld [vmem:[#allocation5 + $0x48] sm:$0xff]
    %v99 = vld [vmem:[#allocation5 + $0x50] sm:$0xff]
    %v100 = vld [vmem:[#allocation5 + $0x58] sm:$0xff]
    %v101 = vld [vmem:[#allocation5 + $0x60] sm:$0xff]
    %v102 = vld [vmem:[#allocation5 + $0x68] sm:$0xff]
    %v103 = vld [vmem:[#allocation5 + $0x70] sm:$0xff]
    %v104 = vld [vmem:[#allocation5 + $0x78] sm:$0xff]
    %v105 = vld [vmem:[%s2] sm:$0x1]
    %v107 = vperm.slane %v105, 0
    %109 = vmatpush.msra.mxu0 %v104
    %110 = vmatpush.msra.mxu0 %v103
    %111 = vmatpush.msra.mxu0 %v102
    %112 = vmatpush.msra.mxu0 %v101
    %113 = vmatpush.msra.mxu0 %v100
    %114 = vmatpush.msra.mxu0 %v99
    %115 = vmatpush.msra.mxu0 %v98
    %116 = vmatpush.msra.mxu0 %v97
    %117 = vmatpush.msra.mxu0 %v96
    %118 = vmatpush.msra.mxu0 %v95
    %119 = vmatpush.msra.mxu0 %v94
    %120 = vmatpush.msra.mxu0 %v93
    %121 = vmatpush.msra.mxu0 %v92
    %122 = vmatpush.msra.mxu0 %v91
    %123 = vmatpush.msra.mxu0 %v90
    %124 = vmatpush.msra.mxu0 %v89
    %125 = vmatmul.f32.gmra.mxu0 %v88
    %v126 = vpop.f32.mrf.mxu0
    %v127 = vadd.f32 %v107, %v126
    %128 = vdwg.mxu0
    %v129 = vmax.f32 %v127, 0.0
    %v130 = vld [vmem:[#allocation7] sm:$0xff]
    %v131 = vld [vmem:[#allocation7 + $0x8] sm:$0xff]
    %v132 = vld [vmem:[#allocation7 + $0x10] sm:$0xff]
    %v133 = vld [vmem:[#allocation7 + $0x18] sm:$0xff]
    %v134 = vld [vmem:[#allocation7 + $0x20] sm:$0xff]
    %v135 = vld [vmem:[#allocation7 + $0x28] sm:$0xff]
    %v136 = vld [vmem:[#allocation7 + $0x30] sm:$0xff]
    %v137 = vld [vmem:[#allocation7 + $0x38] sm:$0xff]
    %v138 = vld [vmem:[#allocation7 + $0x40] sm:$0xff]
    %v139 = vld [vmem:[#allocation7 + $0x48] sm:$0xff]
    %v140 = vld [vmem:[#allocation7 + $0x50] sm:$0xff]
    %v141 = vld [vmem:[#allocation7 + $0x58] sm:$0xff]
    %v142 = vld [vmem:[#allocation7 + $0x60] sm:$0xff]
    %v143 = vld [vmem:[#allocation7 + $0x68] sm:$0xff]
    %v144 = vld [vmem:[#allocation7 + $0x70] sm:$0xff]
    %v145 = vld [vmem:[#allocation7 + $0x78] sm:$0xff]
    %v146 = vld [vmem:[%s4] sm:$0x1]
    %v148 = vperm.slane %v146, 0
    %150 = vmatpush.msra.mxu0 %v145
    %151 = vmatpush.msra.mxu0 %v144
    %152 = vmatpush.msra.mxu0 %v143
    %153 = vmatpush.msra.mxu0 %v142
    %154 = vmatpush.msra.mxu0 %v141
    %155 = vmatpush.msra.mxu0 %v140
    %156 = vmatpush.msra.mxu0 %v139
    %157 = vmatpush.msra.mxu0 %v138
    %158 = vmatpush.msra.mxu0 %v137
    %159 = vmatpush.msra.mxu0 %v136
    %160 = vmatpush.msra.mxu0 %v135
    %161 = vmatpush.msra.mxu0 %v134
    %162 = vmatpush.msra.mxu0 %v133
    %163 = vmatpush.msra.mxu0 %v132
    %164 = vmatpush.msra.mxu0 %v131
    %165 = vmatpush.msra.mxu0 %v130
    %166 = vmatmul.f32.gmra.mxu0 %v129
    %v167 = vpop.f32.mrf.mxu0
    %v168 = vadd.f32 %v148, %v167
    %169 = vdwg.mxu0
    %v170 = vmax.f32 %v168, 0.0
    %v171 = vld [vmem:[#allocation8] sm:$0xff]
    %v172 = vld [vmem:[#allocation8 + $0x8] sm:$0xff]
    %v173 = vld [vmem:[#allocation8 + $0x10] sm:$0xff]
    %v174 = vld [vmem:[#allocation8 + $0x18] sm:$0xff]
    %v175 = vld [vmem:[#allocation8 + $0x20] sm:$0xff]
    %v176 = vld [vmem:[#allocation8 + $0x28] sm:$0xff]
    %v177 = vld [vmem:[#allocation8 + $0x30] sm:$0xff]
    %v178 = vld [vmem:[#allocation8 + $0x38] sm:$0xff]
    %v179 = vld [vmem:[#allocation8 + $0x40] sm:$0xff]
    %v180 = vld [vmem:[#allocation8 + $0x48] sm:$0xff]
    %v181 = vld [vmem:[#allocation8 + $0x50] sm:$0xff]
    %v182 = vld [vmem:[#allocation8 + $0x58] sm:$0xff]
    %v183 = vld [vmem:[#allocation8 + $0x60] sm:$0xff]
    %v184 = vld [vmem:[#allocation8 + $0x68] sm:$0xff]
    %v185 = vld [vmem:[#allocation8 + $0x70] sm:$0xff]
    %v186 = vld [vmem:[#allocation8 + $0x78] sm:$0xff]
    %v187 = vld [vmem:[%s6] sm:$0x1]
    %v189 = vperm.slane %v187, 0
    %191 = vmatpush.msra.mxu0 %v186
    %192 = vmatpush.msra.mxu0 %v185
    %193 = vmatpush.msra.mxu0 %v184
    %194 = vmatpush.msra.mxu0 %v183
    %195 = vmatpush.msra.mxu0 %v182
    %196 = vmatpush.msra.mxu0 %v181
    %197 = vmatpush.msra.mxu0 %v180
    %198 = vmatpush.msra.mxu0 %v179
    %199 = vmatpush.msra.mxu0 %v178
    %200 = vmatpush.msra.mxu0 %v177
    %201 = vmatpush.msra.mxu0 %v176
    %202 = vmatpush.msra.mxu0 %v175
    %203 = vmatpush.msra.mxu0 %v174
    %204 = vmatpush.msra.mxu0 %v173
    %205 = vmatpush.msra.mxu0 %v172
    %206 = vmatpush.msra.mxu0 %v171
    %207 = vmatmul.f32.gmra.mxu0 %v170
    %v208 = vpop.f32.mrf.mxu0
    %v209 = vadd.f32 %v189, %v208
    %210 = vdwg.mxu0
    %v211 = vxor.u32 %v209, 2147483648
    %v212 = vmul.f32 %v211, 1.442695
    %v213 = vpow.pop %v212
    %v214 = vadd.f32 %v213, 1.0
    %v215 = vrcp.pop %v214
    %v216 = vmul.f32 %v214, %v215
    %v217 = vsub.f32 1.0, %v216
    %v218 = vmul.f32 %v215, %v217
    %v219 = vadd.f32 %v215, %v218
    %vm220 = vweird.f32 %v214
    %vm221 = vweird.f32 %v215
    %vm222 = vmor %vm220, %vm221
    %v223 = vsel %vm222, %v215, %v219
    %v224 = vand.u32 2147483647, %v214
    %vm225 = vcmp.eq.f32.partialorder %v224, 8.507059e+37
    %v226 = vand.u32 %v214, 2147483648
    %v227 = vor.u32 1.1754944e-38, %v226
    %v228 = vsel %vm225, %v227, %v223
    %v229 = vmul.f32 1.0, %v228
    %230 = vst [vmem:[#allocation10] sm:$0xff] %v229
    // Predicated region
    $region46: #{tpu_custom_call.1} parent=1 // pred_check
      _
    $region47: #{tpu_custom_call.1} parent=1 // pred_check_branch
      %232 = sbr.rel (0) target = $region49
    $region48: #{tpu_custom_call.1} parent=1 // pred_region
      %234 = vsyncadd [#allocation4], 0
      %s236 = sshll.u32 [#allocation10], 4
      %s237 = int_to_ptr.vmem [resolvable:$true] %s236
      %s238 = sshll.u32 %s7, 4
      %s239 = int_to_ptr.hbm [resolvable:$true] %s238
      %241 = dma.vmem_to_hbm [thread:$0]  %s237, 128, %s239, [#allocation4]
    $region49: #{tpu_custom_call.1} parent=1 // pred_fallthru
      _
    // Predicated region
    $region50: #{tpu_custom_call.1} parent=1 // pred_check
      _
    $region51: #{tpu_custom_call.1} parent=1 // pred_check_branch
      %243 = sbr.rel (0) target = $region53
    $region52: #{tpu_custom_call.1} parent=1 // pred_region
      %245 = dma.done [#allocation4], 128
    $region53: #{tpu_custom_call.1} parent=1 // pred_fallthru
      _
    %246 = vsyncpa [#allocation3], 1
    %247 = vsyncpa [#allocation6], 1
    %248 = vsyncpa [#allocation9], 1
    %249 = vsyncpa [#allocation4], 1

// kernel: tpu_custom_call.1
$region0: #{tpu_custom_call.1}
  #allocation0 [shape = 'u32[]', space=smem, size = 0x4, offset = 0x4, fixed_abs, tag = 'smem constant byte address 0x4 - core index']
  #allocation1 [shape = 'u32[72,128]{1,0:T(1,128)}', space=vmem, size = 0x9000, scoped, tag = 'internal scratch']
  %s0 = inlined_call_operand.hbm [shape: f32[8,128], index: 0, kind: input, shape index: {}]
  %s1 = inlined_call_operand.hbm [shape: f32[128,128], index: 1, kind: input, shape index: {}]
  %s2 = inlined_call_operand.vmem [shape: f32[1,128], index: 2, kind: input, shape index: {}]
  %s3 = inlined_call_operand.hbm [shape: f32[128,128], index: 3, kind: input, shape index: {}]
  %s4 = inlined_call_operand.vmem [shape: f32[1,128], index: 4, kind: input, shape index: {}]
  %s5 = inlined_call_operand.hbm [shape: f32[128,128], index: 5, kind: input, shape index: {}]
  %s6 = inlined_call_operand.vmem [shape: f32[1,128], index: 6, kind: input, shape index: {}]
  %s7 = inlined_call_operand.hbm [shape: f32[8,128], index: 7, kind: output, shape index: {}]
  %s8 = sld [smem:[#allocation0]]
  $region54: #{tpu_custom_call.1} parent=0
    _
  %s10 = ssub.s32 1, %s8
  %s11 = scalar_select 0, %s10, %s8
  $region1: #{tpu_custom_call.1} parent=0
    #allocation2 [shape = 'u8[4096]{0}', space=vmem, size = 0x1000, scoped, tag = 'input window, operand 0, single buffered']
    #allocation3 [shape = 's32[1]{0}', space=sflag, size = 0x4, scoped, tag = 'scoped memory for tpu_custom_call.1']
    #allocation4 [shape = 's32[1]{0}', space=sflag, size = 0x4, scoped, tag = 'scoped memory for tpu_custom_call.1']
    #allocation5 [shape = 'u8[65536]{0}', space=vmem, size = 0x10000, scoped, tag = 'input window, operand 1, single buffered']
    #allocation6 [shape = 's32[1]{0}', space=sflag, size = 0x4, scoped, tag = 'scoped memory for tpu_custom_call.1']
    #allocation7 [shape = 'u8[65536]{0}', space=vmem, size = 0x10000, scoped, tag = 'input window, operand 3, single buffered']
    #allocation8 [shape = 'u8[65536]{0}', space=vmem, size = 0x10000, scoped, tag = 'input window, operand 5, single buffered']
    #allocation9 [shape = 's32[1]{0}', space=sflag, size = 0x4, scoped, tag = 'scoped memory for tpu_custom_call.1']
    #allocation10 [shape = 'u8[4096]{0}', space=vmem, size = 0x1000, scoped, tag = 'output window, operand 0, single buffered']
    %12 = vsyncpa [#allocation3], 0
    %13 = vsyncpa [#allocation6], 0
    %14 = vsyncpa [#allocation9], 0
    %15 = vsyncpa [#allocation4], 0
    // Predicated region
    $region2: #{tpu_custom_call.1} parent=1 // pred_check
      _
    $region3: #{tpu_custom_call.1} parent=1 // pred_check_branch
      %17 = sbr.rel (0) target = $region5
    $region4: #{tpu_custom_call.1} parent=1 // pred_region
      %19 = vsyncadd [#allocation3], 0
      %s21 = sshll.u32 %s0, 4
      %s22 = int_to_ptr.hbm [resolvable:$true] %s21
      %s23 = sshll.u32 [#allocation2], 4
      %s24 = int_to_ptr.vmem [resolvable:$true] %s23
      %26 = dma.hbm_to_vmem [thread:$0]  %s22, 128, %s24, [#allocation3]
    $region5: #{tpu_custom_call.1} parent=1 // pred_fallthru
      _
    // Predicated region
    $region6: #{tpu_custom_call.1} parent=1 // pred_check
      _
    $region7: #{tpu_custom_call.1} parent=1 // pred_check_branch
      %28 = sbr.rel (0) target = $region9
    $region8: #{tpu_custom_call.1} parent=1 // pred_region
      %30 = vsyncadd [#allocation6], 0
      %s31 = sshll.u32 %s1, 4
      %s32 = int_to_ptr.hbm [resolvable:$true] %s31
      %s33 = sshll.u32 [#allocation5], 4
      %s34 = int_to_ptr.vmem [resolvable:$true] %s33
      %39 = dma.hbm_to_vmem [thread:$0]  %s32, 2048, %s34, [#allocation6], 128, 128, 8
    $region9: #{tpu_custom_call.1} parent=1 // pred_fallthru
      _
    // Predicated region
    $region10: #{tpu_custom_call.1} parent=1 // pred_check
      _
    $region11: #{tpu_custom_call.1} parent=1 // pred_check_branch
      %41 = sbr.rel (0) target = $region13
    $region12: #{tpu_custom_call.1} parent=1 // pred_region
      _
    $region13: #{tpu_custom_call.1} parent=1 // pred_fallthru
      _
    // Predicated region
    $region14: #{tpu_custom_call.1} parent=1 // pred_check
      _
    $region15: #{tpu_custom_call.1} parent=1 // pred_check_branch
      %43 = sbr.rel (0) target = $region17
    $region16: #{tpu_custom_call.1} parent=1 // pred_region
      %45 = vsyncadd [#allocation6], 0
      %s46 = sshll.u32 %s3, 4
      %s47 = int_to_ptr.hbm [resolvable:$true] %s46
      %s48 = sshll.u32 [#allocation7], 4
      %s49 = int_to_ptr.vmem [resolvable:$true] %s48
      %54 = dma.hbm_to_vmem [thread:$0]  %s47, 2048, %s49, [#allocation6], 128, 128, 8
    $region17: #{tpu_custom_call.1} parent=1 // pred_fallthru
      _
    // Predicated region
    $region18: #{tpu_custom_call.1} parent=1 // pred_check
      _
    $region19: #{tpu_custom_call.1} parent=1 // pred_check_branch
      %56 = sbr.rel (0) target = $region21
    $region20: #{tpu_custom_call.1} parent=1 // pred_region
      _
    $region21: #{tpu_custom_call.1} parent=1 // pred_fallthru
      _
    // Predicated region
    $region22: #{tpu_custom_call.1} parent=1 // pred_check
      _
    $region23: #{tpu_custom_call.1} parent=1 // pred_check_branch
      %58 = sbr.rel (0) target = $region25
    $region24: #{tpu_custom_call.1} parent=1 // pred_region
      %60 = vsyncadd [#allocation9], 0
      %s61 = sshll.u32 %s5, 4
      %s62 = int_to_ptr.hbm [resolvable:$true] %s61
      %s63 = sshll.u32 [#allocation8], 4
      %s64 = int_to_ptr.vmem [resolvable:$true] %s63
      %69 = dma.hbm_to_vmem [thread:$0]  %s62, 2048, %s64, [#allocation9], 128, 128, 8
    $region25: #{tpu_custom_call.1} parent=1 // pred_fallthru
      _
    // Predicated region
    $region26: #{tpu_custom_call.1} parent=1 // pred_check
      _
    $region27: #{tpu_custom_call.1} parent=1 // pred_check_branch
      %71 = sbr.rel (0) target = $region29
    $region28: #{tpu_custom_call.1} parent=1 // pred_region
      _
    $region29: #{tpu_custom_call.1} parent=1 // pred_fallthru
      _
    // Predicated region
    $region30: #{tpu_custom_call.1} parent=1 // pred_check
      _
    $region31: #{tpu_custom_call.1} parent=1 // pred_check_branch
      %73 = sbr.rel (0) target = $region33
    $region32: #{tpu_custom_call.1} parent=1 // pred_region
      %75 = dma.done [#allocation3], 128
    $region33: #{tpu_custom_call.1} parent=1 // pred_fallthru
      _
    // Predicated region
    $region34: #{tpu_custom_call.1} parent=1 // pred_check
      _
    $region35: #{tpu_custom_call.1} parent=1 // pred_check_branch
      %77 = sbr.rel (0) target = $region37
    $region36: #{tpu_custom_call.1} parent=1 // pred_region
      %79 = dma.done [#allocation6], 2048
    $region37: #{tpu_custom_call.1} parent=1 // pred_fallthru
      _
    // Predicated region
    $region38: #{tpu_custom_call.1} parent=1 // pred_check
      _
    $region39: #{tpu_custom_call.1} parent=1 // pred_check_branch
      %81 = sbr.rel (0) target = $region41
    $region40: #{tpu_custom_call.1} parent=1 // pred_region
      %83 = dma.done [#allocation6], 2048
    $region41: #{tpu_custom_call.1} parent=1 // pred_fallthru
      _
    // Predicated region
    $region42: #{tpu_custom_call.1} parent=1 // pred_check
      _
    $region43: #{tpu_custom_call.1} parent=1 // pred_check_branch
      %85 = sbr.rel (0) target = $region45
    $region44: #{tpu_custom_call.1} parent=1 // pred_region
      %87 = dma.done [#allocation9], 2048
    $region45: #{tpu_custom_call.1} parent=1 // pred_fallthru
      _
    %v88 = vld [vmem:[#allocation2] sm:$0xff]
    %v89 = vld [vmem:[#allocation5] sm:$0xff]
    %v90 = vld [vmem:[#allocation5 + $0x8] sm:$0xff]
    %v91 = vld [vmem:[#allocation5 + $0x10] sm:$0xff]
    %v92 = vld [vmem:[#allocation5 + $0x18] sm:$0xff]
    %v93 = vld [vmem:[#allocation5 + $0x20] sm:$0xff]
    %v94 = vld [vmem:[#allocation5 + $0x28] sm:$0xff]
    %v95 = vld [vmem:[#allocation5 + $0x30] sm:$0xff]
    %v96 = vld [vmem:[#allocation5 + $0x38] sm:$0xff]
    %v97 = vld [vmem:[#allocation5 + $0x40] sm:$0xff]
    %v98 = vld [vmem:[#allocation5 + $0x48] sm:$0xff]
    %v99 = vld [vmem:[#allocation5 + $0x50] sm:$0xff]
    %v100 = vld [vmem:[#allocation5 + $0x58] sm:$0xff]
    %v101 = vld [vmem:[#allocation5 + $0x60] sm:$0xff]
    %v102 = vld [vmem:[#allocation5 + $0x68] sm:$0xff]
    %v103 = vld [vmem:[#allocation5 + $0x70] sm:$0xff]
    %v104 = vld [vmem:[#allocation5 + $0x78] sm:$0xff]
    %v105 = vld [vmem:[%s2] sm:$0x1]
    %v107 = vperm.slane %v105, 0
    %109 = vmatpush.msra.mxu0 %v104
    %110 = vmatpush.msra.mxu0 %v103
    %111 = vmatpush.msra.mxu0 %v102
    %112 = vmatpush.msra.mxu0 %v101
    %113 = vmatpush.msra.mxu0 %v100
    %114 = vmatpush.msra.mxu0 %v99
    %115 = vmatpush.msra.mxu0 %v98
    %116 = vmatpush.msra.mxu0 %v97
    %117 = vmatpush.msra.mxu0 %v96
    %118 = vmatpush.msra.mxu0 %v95
    %119 = vmatpush.msra.mxu0 %v94
    %120 = vmatpush.msra.mxu0 %v93
    %121 = vmatpush.msra.mxu0 %v92
    %122 = vmatpush.msra.mxu0 %v91
    %123 = vmatpush.msra.mxu0 %v90
    %124 = vmatpush.msra.mxu0 %v89
    %125 = vmatmul.f32.gmra.mxu0 %v88
    %v126 = vpop.f32.mrf.mxu0
    %v127 = vadd.f32 %v107, %v126
    %128 = vdwg.mxu0
    %v129 = vmax.f32 %v127, 0.0
    %v130 = vld [vmem:[#allocation7] sm:$0xff]
    %v131 = vld [vmem:[#allocation7 + $0x8] sm:$0xff]
    %v132 = vld [vmem:[#allocation7 + $0x10] sm:$0xff]
    %v133 = vld [vmem:[#allocation7 + $0x18] sm:$0xff]
    %v134 = vld [vmem:[#allocation7 + $0x20] sm:$0xff]
    %v135 = vld [vmem:[#allocation7 + $0x28] sm:$0xff]
    %v136 = vld [vmem:[#allocation7 + $0x30] sm:$0xff]
    %v137 = vld [vmem:[#allocation7 + $0x38] sm:$0xff]
    %v138 = vld [vmem:[#allocation7 + $0x40] sm:$0xff]
    %v139 = vld [vmem:[#allocation7 + $0x48] sm:$0xff]
    %v140 = vld [vmem:[#allocation7 + $0x50] sm:$0xff]
    %v141 = vld [vmem:[#allocation7 + $0x58] sm:$0xff]
    %v142 = vld [vmem:[#allocation7 + $0x60] sm:$0xff]
    %v143 = vld [vmem:[#allocation7 + $0x68] sm:$0xff]
    %v144 = vld [vmem:[#allocation7 + $0x70] sm:$0xff]
    %v145 = vld [vmem:[#allocation7 + $0x78] sm:$0xff]
    %v146 = vld [vmem:[%s4] sm:$0x1]
    %v148 = vperm.slane %v146, 0
    %150 = vmatpush.msra.mxu0 %v145
    %151 = vmatpush.msra.mxu0 %v144
    %152 = vmatpush.msra.mxu0 %v143
    %153 = vmatpush.msra.mxu0 %v142
    %154 = vmatpush.msra.mxu0 %v141
    %155 = vmatpush.msra.mxu0 %v140
    %156 = vmatpush.msra.mxu0 %v139
    %157 = vmatpush.msra.mxu0 %v138
    %158 = vmatpush.msra.mxu0 %v137
    %159 = vmatpush.msra.mxu0 %v136
    %160 = vmatpush.msra.mxu0 %v135
    %161 = vmatpush.msra.mxu0 %v134
    %162 = vmatpush.msra.mxu0 %v133
    %163 = vmatpush.msra.mxu0 %v132
    %164 = vmatpush.msra.mxu0 %v131
    %165 = vmatpush.msra.mxu0 %v130
    %166 = vmatmul.f32.gmra.mxu0 %v129
    %v167 = vpop.f32.mrf.mxu0
    %v168 = vadd.f32 %v148, %v167
    %169 = vdwg.mxu0
    %v170 = vmax.f32 %v168, 0.0
    %v171 = vld [vmem:[#allocation8] sm:$0xff]
    %v172 = vld [vmem:[#allocation8 + $0x8] sm:$0xff]
    %v173 = vld [vmem:[#allocation8 + $0x10] sm:$0xff]
    %v174 = vld [vmem:[#allocation8 + $0x18] sm:$0xff]
    %v175 = vld [vmem:[#allocation8 + $0x20] sm:$0xff]
    %v176 = vld [vmem:[#allocation8 + $0x28] sm:$0xff]
    %v177 = vld [vmem:[#allocation8 + $0x30] sm:$0xff]
    %v178 = vld [vmem:[#allocation8 + $0x38] sm:$0xff]
    %v179 = vld [vmem:[#allocation8 + $0x40] sm:$0xff]
    %v180 = vld [vmem:[#allocation8 + $0x48] sm:$0xff]
    %v181 = vld [vmem:[#allocation8 + $0x50] sm:$0xff]
    %v182 = vld [vmem:[#allocation8 + $0x58] sm:$0xff]
    %v183 = vld [vmem:[#allocation8 + $0x60] sm:$0xff]
    %v184 = vld [vmem:[#allocation8 + $0x68] sm:$0xff]
    %v185 = vld [vmem:[#allocation8 + $0x70] sm:$0xff]
    %v186 = vld [vmem:[#allocation8 + $0x78] sm:$0xff]
    %v187 = vld [vmem:[%s6] sm:$0x1]
    %v189 = vperm.slane %v187, 0
    %191 = vmatpush.msra.mxu0 %v186
    %192 = vmatpush.msra.mxu0 %v185
    %193 = vmatpush.msra.mxu0 %v184
    %194 = vmatpush.msra.mxu0 %v183
    %195 = vmatpush.msra.mxu0 %v182
    %196 = vmatpush.msra.mxu0 %v181
    %197 = vmatpush.msra.mxu0 %v180
    %198 = vmatpush.msra.mxu0 %v179
    %199 = vmatpush.msra.mxu0 %v178
    %200 = vmatpush.msra.mxu0 %v177
    %201 = vmatpush.msra.mxu0 %v176
    %202 = vmatpush.msra.mxu0 %v175
    %203 = vmatpush.msra.mxu0 %v174
    %204 = vmatpush.msra.mxu0 %v173
    %205 = vmatpush.msra.mxu0 %v172
    %206 = vmatpush.msra.mxu0 %v171
    %207 = vmatmul.f32.gmra.mxu0 %v170
    %v208 = vpop.f32.mrf.mxu0
    %v209 = vadd.f32 %v189, %v208
    %210 = vdwg.mxu0
    %v211 = vxor.u32 %v209, 2147483648
    %v212 = vmul.f32 %v211, 1.442695
    %v213 = vpow.pop %v212
    %v214 = vadd.f32 %v213, 1.0
    %v215 = vrcp.pop %v214
    %v216 = vmul.f32 %v214, %v215
    %v217 = vsub.f32 1.0, %v216
    %v218 = vmul.f32 %v215, %v217
    %v219 = vadd.f32 %v215, %v218
    %vm220 = vweird.f32 %v214
    %vm221 = vweird.f32 %v215
    %vm222 = vmor %vm220, %vm221
    %v223 = vsel %vm222, %v215, %v219
    %v224 = vand.u32 2147483647, %v214
    %vm225 = vcmp.eq.f32.partialorder %v224, 8.507059e+37
    %v226 = vand.u32 %v214, 2147483648
    %v227 = vor.u32 1.1754944e-38, %v226
    %v228 = vsel %vm225, %v227, %v223
    %v229 = vmul.f32 1.0, %v228
    %230 = vst [vmem:[#allocation10] sm:$0xff] %v229
    // Predicated region
    $region46: #{tpu_custom_call.1} parent=1 // pred_check
      _
    $region47: #{tpu_custom_call.1} parent=1 // pred_check_branch
      %232 = sbr.rel (0) target = $region49
    $region48: #{tpu_custom_call.1} parent=1 // pred_region
      %234 = vsyncadd [#allocation4], 0
      %s236 = sshll.u32 [#allocation10], 4
      %s237 = int_to_ptr.vmem [resolvable:$true] %s236
      %s238 = sshll.u32 %s7, 4
      %s239 = int_to_ptr.hbm [resolvable:$true] %s238
      %241 = dma.vmem_to_hbm [thread:$0]  %s237, 128, %s239, [#allocation4]
    $region49: #{tpu_custom_call.1} parent=1 // pred_fallthru
      _
    // Predicated region
    $region50: #{tpu_custom_call.1} parent=1 // pred_check
      _
    $region51: #{tpu_custom_call.1} parent=1 // pred_check_branch
      %243 = sbr.rel (0) target = $region53
    $region52: #{tpu_custom_call.1} parent=1 // pred_region
      %245 = dma.done [#allocation4], 128
    $region53: #{tpu_custom_call.1} parent=1 // pred_fallthru
      _
    %246 = vsyncpa [#allocation3], 1
    %247 = vsyncpa [#allocation6], 1
    %248 = vsyncpa [#allocation9], 1
    %249 = vsyncpa [#allocation4], 1

</llo_original>
